<compile_context>
chip_gen: v5e
topology: v5e:2x2
jax: 0.10.0
libtpu: 0.0.40
codegen_flags: <defaults>
</compile_context>

<pallas_src>
import numpy as np
import jax
import jax.numpy as jnp
from jax.experimental import pallas as pl
from jax.experimental.pallas import tpu as pltpu


# ----------------------------------------------------------------------------- 
# Module-structure helpers (mirror AutoEncoderModule.__init__ exactly)
# -----------------------------------------------------------------------------
def build_layer_dims(n_features: int, sequence_length: int, hidden_size: int):
    input_length = n_features * sequence_length
    dec_steps = 2 ** np.arange(max(np.ceil(np.log2(hidden_size)), 2),
                               np.log2(input_length))[1:]
    dec_setup = np.concatenate([[hidden_size], dec_steps.repeat(2), [input_length]])
    enc_setup = dec_setup[::-1]
    enc_pairs = [(int(a), int(b)) for a, b in enc_setup.reshape(-1, 2)]
    dec_pairs = [(int(a), int(b)) for a, b in dec_setup.reshape(-1, 2)]
    return enc_pairs, dec_pairs


def init_linear_params(key, pairs):
    """torch.nn.Linear-style U(-1/sqrt(fan_in), +1/sqrt(fan_in)) init.
    Weights stored already transposed to (fan_in, fan_out); bias as (fan_out,)."""
    params = []
    for fan_in, fan_out in pairs:
        key, kw, kb = jax.random.split(key, 3)
        bound = 1.0 / np.sqrt(fan_in)
        w = jax.random.uniform(kw, (fan_in, fan_out), jnp.float32, -bound, bound)
        b = jax.random.uniform(kb, (fan_out,), jnp.float32, -bound, bound)
        params.append((w, b))
    return key, params


def _round_up(x: int, m: int) -> int:
    return ((x + m - 1) // m) * m


def _pad_and_pack_params(all_params, pad: int, pack: int, lw: int):
    """Zero-pad each (din,dout) weight to (PAD,PAD), expand to a block-diagonal
    (LW,LW) bf16 matrix (pack copies on the diagonal), and stack all layers."""
    eye = jnp.eye(pack, dtype=jnp.float32)
    w_list, b_list = [], []
    for w, b in all_params:
        din, dout = w.shape
        w_pad = jnp.zeros((pad, pad), jnp.float32).at[:din, :dout].set(w)
        w_big = jnp.kron(eye, w_pad) if pack > 1 else w_pad
        w_list.append(w_big.astype(jnp.bfloat16))
        b_pad = jnp.zeros((pad,), jnp.float32).at[:dout].set(b)
        b_list.append(jnp.tile(b_pad, pack).reshape(1, lw))
    return jnp.stack(w_list), jnp.stack(b_list)


# ----------------------------------------------------------------------------- 
# Kernel
# -----------------------------------------------------------------------------
def make_autoencoder_kernel(n_enc: int, n_total: int):
    """x (bf16, lane-dense), stacked weights (bf16) & biases (f32)
       -> reconstruction slab (f32), latent slab (f32).
    Tanh follows every Linear except the last encoder and last decoder layer."""
    def kernel(x_ref, w_ref, b_ref, out_ref, lat_ref):
        h = x_ref[...]                                     # (SB, LW) bf16
        for i in range(n_total):                           # static unroll, ~6 layers
            acc = jnp.dot(h, w_ref[i],                     # MXU, f32 accumulation
                          preferred_element_type=jnp.float32)
            acc = acc + b_ref[i]                           # f32 bias add (VPU)
            if i == n_enc - 1:                             # encoder output: no tanh
                lat_ref[...] = acc
                h = acc.astype(jnp.bfloat16)
            elif i == n_total - 1:                         # decoder output: no tanh
                out_ref[...] = acc
            else:
                h = jnp.tanh(acc).astype(jnp.bfloat16)     # f32 tanh (EUP), bf16 carry
    return kernel


# ----------------------------------------------------------------------------- 
# Wrapper
# -----------------------------------------------------------------------------
def autoencoder_forward(ts_batch, enc_params, dec_params, hidden_size,
                        return_latent: bool = False, batch_tile: int = 512):
    B = ts_batch.shape[0]
    x = ts_batch.reshape(B, -1).astype(jnp.float32)        # == ts_batch.view(B, -1).float()
    L = x.shape[1]

    all_params = list(enc_params) + list(dec_params)
    n_enc, n_total = len(enc_params), len(all_params)
    dims = [L] + [w.shape[1] for w, _ in all_params]
    max_dim = max(dims)

    # Lane-dense packing: pad layer widths to PAD and pack `pack` batch rows per
    # 128-lane super-row so every kernel load/store is a full, unmasked vreg.
    if max_dim <= 128:
        pad = max(8, 1 << int(np.ceil(np.log2(max_dim))))
        pack = 128 // pad
    else:
        pad = _round_up(max_dim, 128)
        pack = 1
    lw = pad * pack                                        # lane width (>=128, multiple of 128)

    row_quantum = pack * 8                                 # keeps super-row tiles sublane-aligned
    tb = _round_up(min(batch_tile, _round_up(B, row_quantum)), row_quantum)
    b_padded = _round_up(B, tb)                            # pad batch -> no partial tiles
    sb = tb // pack                                        # super-rows per grid tile
    n_super = b_padded // pack

    xp = jnp.zeros((b_padded, pad), jnp.float32).at[:B, :L].set(x)
    x_packed = xp.reshape(n_super, lw).astype(jnp.bfloat16)

    w_stack, b_stack = _pad_and_pack_params(all_params, pad, pack, lw)

    kernel = make_autoencoder_kernel(n_enc, n_total)
    grid = (b_padded // tb,)

    cost = pl.CostEstimate(
        flops=2 * n_super * lw * lw * n_total,
        transcendentals=n_super * lw * max(n_total - 2, 0),
        bytes_accessed=(n_super * lw * 2                   # x (bf16)
                        + n_total * lw * lw * 2            # weights (bf16)
                        + n_total * lw * 4                 # biases (f32)
                        + 2 * n_super * lw * 4),           # rec + latent slabs (f32)
    )

    rec_slab, lat_slab = pl.pallas_call(
        kernel,
        out_shape=(jax.ShapeDtypeStruct((n_super, lw), jnp.float32),
                   jax.ShapeDtypeStruct((n_super, lw), jnp.float32)),
        grid=grid,
        in_specs=[
            pl.BlockSpec((sb, lw), lambda i: (i, 0)),                  # x: tiled over batch
            pl.BlockSpec((n_total, lw, lw), lambda i: (0, 0, 0)),      # weights: VMEM-resident
            pl.BlockSpec((n_total, 1, lw), lambda i: (0, 0, 0)),       # biases:  VMEM-resident
        ],
        out_specs=(pl.BlockSpec((sb, lw), lambda i: (i, 0)),
                   pl.BlockSpec((sb, lw), lambda i: (i, 0))),
        compiler_params=pltpu.CompilerParams(
            dimension_semantics=("parallel",)),                        # megacore on v7x
        cost_estimate=cost,
    )(x_packed, w_stack, b_stack)

    rec = rec_slab.reshape(b_padded, pad)[:B, :L].reshape(ts_batch.shape)
    latent = lat_slab.reshape(b_padded, pad)[:B, :hidden_size]
    return (rec, latent) if return_latent else rec


# ----------------------------------------------------------------------------- 
# Pure-JAX references
# -----------------------------------------------------------------------------
def autoencoder_forward_ref(ts_batch, enc_params, dec_params,
                            return_latent: bool = False, emulate_bf16: bool = False):
    B = ts_batch.shape[0]
    h = ts_batch.reshape(B, -1).astype(jnp.float32)
    if emulate_bf16:
        h = h.astype(jnp.bfloat16)
    n_enc = len(enc_params)
    all_params = list(enc_params) + list(dec_params)
    latent = None
    for i, (w, b) in enumerate(all_params):
        if emulate_bf16:
            w = w.astype(jnp.bfloat16)
        acc = jnp.dot(h, w, preferred_element_type=jnp.float32) + b
        last_enc = (i == n_enc - 1)
        last_dec = (i == len(all_params) - 1)
        if last_enc:
            latent = acc
            h = acc.astype(jnp.bfloat16) if emulate_bf16 else acc
        elif last_dec:
            h = acc
        else:
            h = jnp.tanh(acc)
            if emulate_bf16:
                h = h.astype(jnp.bfloat16)
    rec = h.astype(jnp.float32).reshape(ts_batch.shape)
    latent = latent.astype(jnp.float32)
    return (rec, latent) if return_latent else rec


# ----------------------------------------------------------------------------- 
# Demo / self-check
# -----------------------------------------------------------------------------
if __name__ == "__main__":
    # n_features=4, sequence_length=8 -> input_length=32, hidden_size=4
    #   encoder: Linear(32,16) Tanh Linear(16,8) Tanh Linear(8,4)
    #   decoder: Linear(4,8)  Tanh Linear(8,16) Tanh Linear(16,32)
    n_features, sequence_length, hidden_size = 4, 8, 4
    batch = 2

    enc_pairs, dec_pairs = build_layer_dims(n_features, sequence_length, hidden_size)

    key = jax.random.PRNGKey(0)
    key, enc_params = init_linear_params(key, enc_pairs)
    key, dec_params = init_linear_params(key, dec_pairs)

    key, kx = jax.random.split(key)
    ts_batch = jax.random.normal(kx, (batch, sequence_length, n_features), jnp.float32)

    rec, latent = autoencoder_forward(ts_batch, enc_params, dec_params, hidden_size,
                                      return_latent=True)
    rec = jax.block_until_ready(rec)
    latent = jax.block_until_ready(latent)

    # Tight check vs a pure-JAX reference that emulates the kernel's bf16 storage.
    rec_bf, lat_bf = autoencoder_forward_ref(ts_batch, enc_params, dec_params,
                                             return_latent=True, emulate_bf16=True)
    np.testing.assert_allclose(np.asarray(rec), np.asarray(rec_bf), rtol=1e-2, atol=1e-2)
    np.testing.assert_allclose(np.asarray(latent), np.asarray(lat_bf), rtol=1e-2, atol=1e-2)

    # Loose check vs the full-f32 PyTorch-equivalent reference (bf16 storage => ~1e-2 err).
    rec_f32, lat_f32 = autoencoder_forward_ref(ts_batch, enc_params, dec_params,
                                               return_latent=True, emulate_bf16=False)
    np.testing.assert_allclose(np.asarray(rec), np.asarray(rec_f32), rtol=5e-2, atol=5e-2)
    np.testing.assert_allclose(np.asarray(latent), np.asarray(lat_f32), rtol=5e-2, atol=5e-2)

    assert rec.shape == ts_batch.shape
    assert latent.shape == (batch, hidden_size)
    print("KERNEL_OK")
</pallas_src>

<mosaic_0001>
module attributes {stable_mosaic.version = 11 : i64} {
  func.func @kernel(%arg0: i32, %arg1: memref<8x128xbf16, #tpu.memory_space<vmem>>, %arg2: memref<6x128x128xbf16, #tpu.memory_space<vmem>>, %arg3: memref<6x1x128xf32, #tpu.memory_space<vmem>>, %arg4: memref<8x128xf32, #tpu.memory_space<vmem>>, %arg5: memref<8x128xf32, #tpu.memory_space<vmem>>) attributes {dimension_semantics = [#tpu.dimension_semantics<parallel>], iteration_bounds = array<i64: 1>, scalar_prefetch = 0 : i64, scratch_operands = 0 : i64, tpu.core_type = #tpu.core_type<tc>, window_params = [{transform_indices = @transform_0, window_bounds = array<i64: 8, 128>}, {pipeline_mode = #tpu.pipeline_mode<synchronous>, transform_indices = @transform_1, window_bounds = array<i64: 6, 128, 128>}, {pipeline_mode = #tpu.pipeline_mode<synchronous>, transform_indices = @transform_2, window_bounds = array<i64: 6, 1, 128>}, {transform_indices = @transform_3, window_bounds = array<i64: 8, 128>}, {transform_indices = @transform_4, window_bounds = array<i64: 8, 128>}]} {
    %c0 = arith.constant 0 : index
    %c0_0 = arith.constant 0 : index
    %0 = vector.load %arg1[%c0, %c0_0] : memref<8x128xbf16, #tpu.memory_space<vmem>>, vector<8x128xbf16>
    %c0_1 = arith.constant 0 : index
    %c0_2 = arith.constant 0 : index
    %c0_3 = arith.constant 0 : index
    %1 = vector.load %arg2[%c0_1, %c0_2, %c0_3] : memref<6x128x128xbf16, #tpu.memory_space<vmem>>, vector<1x128x128xbf16>
    %2 = vector.shape_cast %1 : vector<1x128x128xbf16> to vector<128x128xbf16>
    %cst = arith.constant dense<0.000000e+00> : vector<8x128xf32>
    %3 = tpu.matmul %0, %2, %cst {dimension_numbers = #tpu.dot_dimension_numbers<[1], [0], [0], [1], [0, 0, 1, 1], [], []>} : vector<8x128xbf16>, vector<128x128xbf16>, vector<8x128xf32> -> vector<8x128xf32>
    %c0_4 = arith.constant 0 : index
    %c0_5 = arith.constant 0 : index
    %c0_6 = arith.constant 0 : index
    %4 = vector.load %arg3[%c0_4, %c0_5, %c0_6] : memref<6x1x128xf32, #tpu.memory_space<vmem>>, vector<1x1x128xf32>
    %5 = vector.shape_cast %4 : vector<1x1x128xf32> to vector<1x128xf32>
    %6 = vector.broadcast %5 : vector<1x128xf32> to vector<8x128xf32>
    %7 = arith.addf %3, %6 : vector<8x128xf32>
    %8 = math.tanh %7 : vector<8x128xf32>
    %9 = arith.truncf %8 : vector<8x128xf32> to vector<8x128xbf16>
    %c1 = arith.constant 1 : index
    %c0_7 = arith.constant 0 : index
    %c0_8 = arith.constant 0 : index
    %10 = vector.load %arg2[%c1, %c0_7, %c0_8] : memref<6x128x128xbf16, #tpu.memory_space<vmem>>, vector<1x128x128xbf16>
    %11 = vector.shape_cast %10 : vector<1x128x128xbf16> to vector<128x128xbf16>
    %cst_9 = arith.constant dense<0.000000e+00> : vector<8x128xf32>
    %12 = tpu.matmul %9, %11, %cst_9 {dimension_numbers = #tpu.dot_dimension_numbers<[1], [0], [0], [1], [0, 0, 1, 1], [], []>} : vector<8x128xbf16>, vector<128x128xbf16>, vector<8x128xf32> -> vector<8x128xf32>
    %c1_10 = arith.constant 1 : index
    %c0_11 = arith.constant 0 : index
    %c0_12 = arith.constant 0 : index
    %13 = vector.load %arg3[%c1_10, %c0_11, %c0_12] : memref<6x1x128xf32, #tpu.memory_space<vmem>>, vector<1x1x128xf32>
    %14 = vector.shape_cast %13 : vector<1x1x128xf32> to vector<1x128xf32>
    %15 = vector.broadcast %14 : vector<1x128xf32> to vector<8x128xf32>
    %16 = arith.addf %12, %15 : vector<8x128xf32>
    %17 = math.tanh %16 : vector<8x128xf32>
    %18 = arith.truncf %17 : vector<8x128xf32> to vector<8x128xbf16>
    %c2 = arith.constant 2 : index
    %c0_13 = arith.constant 0 : index
    %c0_14 = arith.constant 0 : index
    %19 = vector.load %arg2[%c2, %c0_13, %c0_14] : memref<6x128x128xbf16, #tpu.memory_space<vmem>>, vector<1x128x128xbf16>
    %20 = vector.shape_cast %19 : vector<1x128x128xbf16> to vector<128x128xbf16>
    %cst_15 = arith.constant dense<0.000000e+00> : vector<8x128xf32>
    %21 = tpu.matmul %18, %20, %cst_15 {dimension_numbers = #tpu.dot_dimension_numbers<[1], [0], [0], [1], [0, 0, 1, 1], [], []>} : vector<8x128xbf16>, vector<128x128xbf16>, vector<8x128xf32> -> vector<8x128xf32>
    %c2_16 = arith.constant 2 : index
    %c0_17 = arith.constant 0 : index
    %c0_18 = arith.constant 0 : index
    %22 = vector.load %arg3[%c2_16, %c0_17, %c0_18] : memref<6x1x128xf32, #tpu.memory_space<vmem>>, vector<1x1x128xf32>
    %23 = vector.shape_cast %22 : vector<1x1x128xf32> to vector<1x128xf32>
    %24 = vector.broadcast %23 : vector<1x128xf32> to vector<8x128xf32>
    %25 = arith.addf %21, %24 : vector<8x128xf32>
    %c0_19 = arith.constant 0 : index
    %c0_20 = arith.constant 0 : index
    %26 = vector.load %arg5[%c0_19, %c0_20] : memref<8x128xf32, #tpu.memory_space<vmem>>, vector<8x128xf32>
    tpu.vector_store %arg5[%c0_19, %c0_20], %25 {strides = array<i32>} : memref<8x128xf32, #tpu.memory_space<vmem>>, vector<8x128xf32>,
    %27 = arith.truncf %25 : vector<8x128xf32> to vector<8x128xbf16>
    %c3 = arith.constant 3 : index
    %c0_21 = arith.constant 0 : index
    %c0_22 = arith.constant 0 : index
    %28 = vector.load %arg2[%c3, %c0_21, %c0_22] : memref<6x128x128xbf16, #tpu.memory_space<vmem>>, vector<1x128x128xbf16>
    %29 = vector.shape_cast %28 : vector<1x128x128xbf16> to vector<128x128xbf16>
    %cst_23 = arith.constant dense<0.000000e+00> : vector<8x128xf32>
    %30 = tpu.matmul %27, %29, %cst_23 {dimension_numbers = #tpu.dot_dimension_numbers<[1], [0], [0], [1], [0, 0, 1, 1], [], []>} : vector<8x128xbf16>, vector<128x128xbf16>, vector<8x128xf32> -> vector<8x128xf32>
    %c3_24 = arith.constant 3 : index
    %c0_25 = arith.constant 0 : index
    %c0_26 = arith.constant 0 : index
    %31 = vector.load %arg3[%c3_24, %c0_25, %c0_26] : memref<6x1x128xf32, #tpu.memory_space<vmem>>, vector<1x1x128xf32>
    %32 = vector.shape_cast %31 : vector<1x1x128xf32> to vector<1x128xf32>
    %33 = vector.broadcast %32 : vector<1x128xf32> to vector<8x128xf32>
    %34 = arith.addf %30, %33 : vector<8x128xf32>
    %35 = math.tanh %34 : vector<8x128xf32>
    %36 = arith.truncf %35 : vector<8x128xf32> to vector<8x128xbf16>
    %c4 = arith.constant 4 : index
    %c0_27 = arith.constant 0 : index
    %c0_28 = arith.constant 0 : index
    %37 = vector.load %arg2[%c4, %c0_27, %c0_28] : memref<6x128x128xbf16, #tpu.memory_space<vmem>>, vector<1x128x128xbf16>
    %38 = vector.shape_cast %37 : vector<1x128x128xbf16> to vector<128x128xbf16>
    %cst_29 = arith.constant dense<0.000000e+00> : vector<8x128xf32>
    %39 = tpu.matmul %36, %38, %cst_29 {dimension_numbers = #tpu.dot_dimension_numbers<[1], [0], [0], [1], [0, 0, 1, 1], [], []>} : vector<8x128xbf16>, vector<128x128xbf16>, vector<8x128xf32> -> vector<8x128xf32>
    %c4_30 = arith.constant 4 : index
    %c0_31 = arith.constant 0 : index
    %c0_32 = arith.constant 0 : index
    %40 = vector.load %arg3[%c4_30, %c0_31, %c0_32] : memref<6x1x128xf32, #tpu.memory_space<vmem>>, vector<1x1x128xf32>
    %41 = vector.shape_cast %40 : vector<1x1x128xf32> to vector<1x128xf32>
    %42 = vector.broadcast %41 : vector<1x128xf32> to vector<8x128xf32>
    %43 = arith.addf %39, %42 : vector<8x128xf32>
    %44 = math.tanh %43 : vector<8x128xf32>
    %45 = arith.truncf %44 : vector<8x128xf32> to vector<8x128xbf16>
    %c5 = arith.constant 5 : index
    %c0_33 = arith.constant 0 : index
    %c0_34 = arith.constant 0 : index
    %46 = vector.load %arg2[%c5, %c0_33, %c0_34] : memref<6x128x128xbf16, #tpu.memory_space<vmem>>, vector<1x128x128xbf16>
    %47 = vector.shape_cast %46 : vector<1x128x128xbf16> to vector<128x128xbf16>
    %cst_35 = arith.constant dense<0.000000e+00> : vector<8x128xf32>
    %48 = tpu.matmul %45, %47, %cst_35 {dimension_numbers = #tpu.dot_dimension_numbers<[1], [0], [0], [1], [0, 0, 1, 1], [], []>} : vector<8x128xbf16>, vector<128x128xbf16>, vector<8x128xf32> -> vector<8x128xf32>
    %c5_36 = arith.constant 5 : index
    %c0_37 = arith.constant 0 : index
    %c0_38 = arith.constant 0 : index
    %49 = vector.load %arg3[%c5_36, %c0_37, %c0_38] : memref<6x1x128xf32, #tpu.memory_space<vmem>>, vector<1x1x128xf32>
    %50 = vector.shape_cast %49 : vector<1x1x128xf32> to vector<1x128xf32>
    %51 = vector.broadcast %50 : vector<1x128xf32> to vector<8x128xf32>
    %52 = arith.addf %48, %51 : vector<8x128xf32>
    %c0_39 = arith.constant 0 : index
    %c0_40 = arith.constant 0 : index
    %53 = vector.load %arg4[%c0_39, %c0_40] : memref<8x128xf32, #tpu.memory_space<vmem>>, vector<8x128xf32>
    tpu.vector_store %arg4[%c0_39, %c0_40], %52 {strides = array<i32>} : memref<8x128xf32, #tpu.memory_space<vmem>>, vector<8x128xf32>,
    return
  }
  func.func @transform_0(%arg0: i32) -> (i32, i32) {
    %c0_i32 = arith.constant 0 : i32
    %c0_i32_0 = arith.constant 0 : i32
    return %arg0, %c0_i32 : i32, i32
  }
  func.func @transform_1(%arg0: i32) -> (i32, i32, i32) {
    %c0_i32 = arith.constant 0 : i32
    %c0_i32_0 = arith.constant 0 : i32
    %c0_i32_1 = arith.constant 0 : i32
    %c0_i32_2 = arith.constant 0 : i32
    return %c0_i32, %c0_i32_0, %c0_i32_1 : i32, i32, i32
  }
  func.func @transform_2(%arg0: i32) -> (i32, i32, i32) {
    %c0_i32 = arith.constant 0 : i32
    %c0_i32_0 = arith.constant 0 : i32
    %c0_i32_1 = arith.constant 0 : i32
    %c0_i32_2 = arith.constant 0 : i32
    return %c0_i32, %c0_i32_0, %c0_i32_1 : i32, i32, i32
  }
  func.func @transform_3(%arg0: i32) -> (i32, i32) {
    %c0_i32 = arith.constant 0 : i32
    %c0_i32_0 = arith.constant 0 : i32
    return %arg0, %c0_i32 : i32, i32
  }
  func.func @transform_4(%arg0: i32) -> (i32, i32) {
    %c0_i32 = arith.constant 0 : i32
    %c0_i32_0 = arith.constant 0 : i32
    return %arg0, %c0_i32 : i32, i32
  }
}

</mosaic_0001>

<llo_original>
// kernel: tpu_custom_call.1
$region0: #{tpu_custom_call.1}
  #allocation0 [shape = 'u32[]', space=smem, size = 0x4, offset = 0x4, fixed_abs, tag = 'smem constant byte address 0x4 - core index']
  #allocation1 [shape = 'u32[72,128]{1,0:T(1,128)}', space=vmem, size = 0x9000, scoped, tag = 'internal scratch']
  %s0 = inlined_call_operand.hbm [shape: bf16[8,128], index: 0, kind: input, shape index: {}]
  %s1 = inlined_call_operand.hbm [shape: bf16[6,128,128], index: 1, kind: input, shape index: {}]
  %s2 = inlined_call_operand.hbm [shape: f32[6,1,128], index: 2, kind: input, shape index: {}]
  %s3 = inlined_call_operand.hbm [shape: f32[8,128], index: 3, kind: output, shape index: {0}]
  %s4 = inlined_call_operand.hbm [shape: f32[8,128], index: 4, kind: output, shape index: {1}]
  %5 = xla_tuple %s3, %s4
  %s6 = sld [smem:[#allocation0]]
  $region42: #{tpu_custom_call.1} parent=0
    _
  %s8 = ssub.s32 1, %s6
  %s9 = scalar_select 0, %s8, %s6
  $region1: #{tpu_custom_call.1} parent=0
    #allocation2 [shape = 'u8[2048]{0}', space=vmem, size = 0x800, scoped, tag = 'input window, operand 0, single buffered']
    #allocation3 [shape = 's32[1]{0}', space=sflag, size = 0x4, scoped, tag = 'scoped memory for tpu_custom_call.1']
    #allocation4 [shape = 's32[1]{0}', space=sflag, size = 0x4, scoped, tag = 'scoped memory for tpu_custom_call.1']
    #allocation5 [shape = 'u8[196608]{0}', space=vmem, size = 0x30000, scoped, tag = 'input window, operand 1, single buffered']
    #allocation6 [shape = 's32[1]{0}', space=sflag, size = 0x4, scoped, tag = 'scoped memory for tpu_custom_call.1']
    #allocation7 [shape = 'u8[3072]{0}', space=vmem, size = 0xc00, scoped, tag = 'input window, operand 2, single buffered']
    #allocation8 [shape = 'u8[4096]{0}', space=vmem, size = 0x1000, scoped, tag = 'output window, operand 0, single buffered']
    #allocation9 [shape = 'u8[4096]{0}', space=vmem, size = 0x1000, scoped, tag = 'output window, operand 1, single buffered']
    #allocation10 [shape = 's32[1]{0}', space=sflag, size = 0x4, scoped, tag = 'scoped memory for tpu_custom_call.1']
    %10 = vsyncpa [#allocation3], 0
    %11 = vsyncpa [#allocation6], 0
    %12 = vsyncpa [#allocation4], 0
    %13 = vsyncpa [#allocation10], 0
    // Predicated region
    $region2: #{tpu_custom_call.1} parent=1 // pred_check
      _
    $region3: #{tpu_custom_call.1} parent=1 // pred_check_branch
      %15 = sbr.rel (0) target = $region5
    $region4: #{tpu_custom_call.1} parent=1 // pred_region
      %17 = vsyncadd [#allocation3], 0
      %s19 = sshll.u32 %s0, 4
      %s20 = int_to_ptr.hbm [resolvable:$true] %s19
      %s21 = sshll.u32 [#allocation2], 4
      %s22 = int_to_ptr.vmem [resolvable:$true] %s21
      %24 = dma.hbm_to_vmem [thread:$0]  %s20, 64, %s22, [#allocation3]
    $region5: #{tpu_custom_call.1} parent=1 // pred_fallthru
      _
    // Predicated region
    $region6: #{tpu_custom_call.1} parent=1 // pred_check
      _
    $region7: #{tpu_custom_call.1} parent=1 // pred_check_branch
      %26 = sbr.rel (0) target = $region9
    $region8: #{tpu_custom_call.1} parent=1 // pred_region
      %28 = vsyncadd [#allocation6], 0
      %s29 = sshll.u32 %s1, 4
      %s30 = int_to_ptr.hbm [resolvable:$true] %s29
      %s31 = sshll.u32 [#allocation5], 4
      %s32 = int_to_ptr.vmem [resolvable:$true] %s31
      %37 = dma.hbm_to_vmem [thread:$0]  %s30, 6144, %s32, [#allocation6], 64, 64, 4
    $region9: #{tpu_custom_call.1} parent=1 // pred_fallthru
      _
    // Predicated region
    $region10: #{tpu_custom_call.1} parent=1 // pred_check
      _
    $region11: #{tpu_custom_call.1} parent=1 // pred_check_branch
      %39 = sbr.rel (0) target = $region13
    $region12: #{tpu_custom_call.1} parent=1 // pred_region
      %41 = vsyncadd [#allocation6], 0
      %s42 = sshll.u32 %s2, 4
      %s43 = int_to_ptr.hbm [resolvable:$true] %s42
      %s44 = sshll.u32 [#allocation7], 4
      %s45 = int_to_ptr.vmem [resolvable:$true] %s44
      %50 = dma.hbm_to_vmem [thread:$0]  %s43, 96, %s45, [#allocation6], 16, 16, 1
    $region13: #{tpu_custom_call.1} parent=1 // pred_fallthru
      _
    // Predicated region
    $region14: #{tpu_custom_call.1} parent=1 // pred_check
      _
    $region15: #{tpu_custom_call.1} parent=1 // pred_check_branch
      %52 = sbr.rel (0) target = $region17
    $region16: #{tpu_custom_call.1} parent=1 // pred_region
      %54 = dma.done [#allocation3], 64
    $region17: #{tpu_custom_call.1} parent=1 // pred_fallthru
      _
    // Predicated region
    $region18: #{tpu_custom_call.1} parent=1 // pred_check
      _
    $region19: #{tpu_custom_call.1} parent=1 // pred_check_branch
      %56 = sbr.rel (0) target = $region21
    $region20: #{tpu_custom_call.1} parent=1 // pred_region
      %58 = dma.done [#allocation6], 6144
    $region21: #{tpu_custom_call.1} parent=1 // pred_fallthru
      _
    // Predicated region
    $region22: #{tpu_custom_call.1} parent=1 // pred_check
      _
    $region23: #{tpu_custom_call.1} parent=1 // pred_check_branch
      %60 = sbr.rel (0) target = $region25
    $region24: #{tpu_custom_call.1} parent=1 // pred_region
      %62 = dma.done [#allocation6], 96
    $region25: #{tpu_custom_call.1} parent=1 // pred_fallthru
      _
    %v63 = vld [vmem:[#allocation2] sm:$0xf]
    %v64 = vld [vmem:[#allocation5] sm:$0xf]
    %v65 = vld [vmem:[#allocation5 + $0x4] sm:$0xf]
    %v66 = vld [vmem:[#allocation5 + $0x8] sm:$0xf]
    %v67 = vld [vmem:[#allocation5 + $0xc] sm:$0xf]
    %v68 = vld [vmem:[#allocation5 + $0x10] sm:$0xf]
    %v69 = vld [vmem:[#allocation5 + $0x14] sm:$0xf]
    %v70 = vld [vmem:[#allocation5 + $0x18] sm:$0xf]
    %v71 = vld [vmem:[#allocation5 + $0x1c] sm:$0xf]
    %v72 = vld [vmem:[#allocation5 + $0x20] sm:$0xf]
    %v73 = vld [vmem:[#allocation5 + $0x24] sm:$0xf]
    %v74 = vld [vmem:[#allocation5 + $0x28] sm:$0xf]
    %v75 = vld [vmem:[#allocation5 + $0x2c] sm:$0xf]
    %v76 = vld [vmem:[#allocation5 + $0x30] sm:$0xf]
    %v77 = vld [vmem:[#allocation5 + $0x34] sm:$0xf]
    %v78 = vld [vmem:[#allocation5 + $0x38] sm:$0xf]
    %v79 = vld [vmem:[#allocation5 + $0x3c] sm:$0xf]
    %v80 = vld [vmem:[#allocation7] sm:$0x1]
    %v82 = vperm.slane %v80, 0
    %v100 = vunpack.c.l.b16 %v64
    %v101 = vunpack.c.l.b16 %v65
    %v102 = vunpack.c.l.b16 %v66
    %v103 = vunpack.c.l.b16 %v67
    %v104 = vunpack.c.l.b16 %v68
    %v105 = vunpack.c.l.b16 %v69
    %v106 = vunpack.c.l.b16 %v70
    %v107 = vunpack.c.l.b16 %v71
    %v108 = vunpack.c.l.b16 %v72
    %v109 = vunpack.c.l.b16 %v73
    %v110 = vunpack.c.l.b16 %v74
    %v111 = vunpack.c.l.b16 %v75
    %v112 = vunpack.c.l.b16 %v76
    %v113 = vunpack.c.l.b16 %v77
    %v114 = vunpack.c.l.b16 %v78
    %v115 = vunpack.c.l.b16 %v79
    %v116 = vpack.c.b16 %v101, %v100
    %v117 = vpack.c.b16 %v103, %v102
    %v118 = vpack.c.b16 %v105, %v104
    %v119 = vpack.c.b16 %v107, %v106
    %v120 = vpack.c.b16 %v109, %v108
    %v121 = vpack.c.b16 %v111, %v110
    %v122 = vpack.c.b16 %v113, %v112
    %v123 = vpack.c.b16 %v115, %v114
    %132 = vmatpush.bf16.msra.mxu0 %v123
    %133 = vmatpush.bf16.msra.mxu0 %v122
    %134 = vmatpush.bf16.msra.mxu0 %v121
    %135 = vmatpush.bf16.msra.mxu0 %v120
    %136 = vmatpush.bf16.msra.mxu0 %v119
    %137 = vmatpush.bf16.msra.mxu0 %v118
    %138 = vmatpush.bf16.msra.mxu0 %v117
    %139 = vmatpush.bf16.msra.mxu0 %v116
    %140 = vmatmul.bf16.gmra.mxu0 %v63
    %v141 = vpop.f32.mrf.mxu0
    %v142 = vadd.f32 %v82, %v141
    %v143 = vpop.f32.mrf.mxu0
    %144 = vdwg.mxu0
    %v145 = vtanh.pop %v142
    %v146 = vpack.c.bf16 %v145, %v145
    %s147 = scalar_lea.vmem [#allocation5], 64
    %v148 = vld [vmem:[%s147] sm:$0xf]
    %v149 = vld [vmem:[%s147 + $0x4] sm:$0xf]
    %v150 = vld [vmem:[%s147 + $0x8] sm:$0xf]
    %v151 = vld [vmem:[%s147 + $0xc] sm:$0xf]
    %v152 = vld [vmem:[%s147 + $0x10] sm:$0xf]
    %v153 = vld [vmem:[%s147 + $0x14] sm:$0xf]
    %v154 = vld [vmem:[%s147 + $0x18] sm:$0xf]
    %v155 = vld [vmem:[%s147 + $0x1c] sm:$0xf]
    %v156 = vld [vmem:[%s147 + $0x20] sm:$0xf]
    %v157 = vld [vmem:[%s147 + $0x24] sm:$0xf]
    %v158 = vld [vmem:[%s147 + $0x28] sm:$0xf]
    %v159 = vld [vmem:[%s147 + $0x2c] sm:$0xf]
    %v160 = vld [vmem:[%s147 + $0x30] sm:$0xf]
    %v161 = vld [vmem:[%s147 + $0x34] sm:$0xf]
    %v162 = vld [vmem:[%s147 + $0x38] sm:$0xf]
    %v163 = vld [vmem:[%s147 + $0x3c] sm:$0xf]
    %s164 = scalar_lea.vmem [#allocation7], 1
    %v165 = vld [vmem:[%s164] sm:$0x1]
    %v167 = vperm.slane %v165, 0
    %v185 = vunpack.c.l.b16 %v148
    %v186 = vunpack.c.l.b16 %v149
    %v187 = vunpack.c.l.b16 %v150
    %v188 = vunpack.c.l.b16 %v151
    %v189 = vunpack.c.l.b16 %v152
    %v190 = vunpack.c.l.b16 %v153
    %v191 = vunpack.c.l.b16 %v154
    %v192 = vunpack.c.l.b16 %v155
    %v193 = vunpack.c.l.b16 %v156
    %v194 = vunpack.c.l.b16 %v157
    %v195 = vunpack.c.l.b16 %v158
    %v196 = vunpack.c.l.b16 %v159
    %v197 = vunpack.c.l.b16 %v160
    %v198 = vunpack.c.l.b16 %v161
    %v199 = vunpack.c.l.b16 %v162
    %v200 = vunpack.c.l.b16 %v163
    %v201 = vpack.c.b16 %v186, %v185
    %v202 = vpack.c.b16 %v188, %v187
    %v203 = vpack.c.b16 %v190, %v189
    %v204 = vpack.c.b16 %v192, %v191
    %v205 = vpack.c.b16 %v194, %v193
    %v206 = vpack.c.b16 %v196, %v195
    %v207 = vpack.c.b16 %v198, %v197
    %v208 = vpack.c.b16 %v200, %v199
    %217 = vmatpush.bf16.msra.mxu0 %v208
    %218 = vmatpush.bf16.msra.mxu0 %v207
    %219 = vmatpush.bf16.msra.mxu0 %v206
    %220 = vmatpush.bf16.msra.mxu0 %v205
    %221 = vmatpush.bf16.msra.mxu0 %v204
    %222 = vmatpush.bf16.msra.mxu0 %v203
    %223 = vmatpush.bf16.msra.mxu0 %v202
    %224 = vmatpush.bf16.msra.mxu0 %v201
    %225 = vmatmul.bf16.gmra.mxu0 %v146
    %v226 = vpop.f32.mrf.mxu0
    %v227 = vadd.f32 %v167, %v226
    %v228 = vpop.f32.mrf.mxu0
    %229 = vdwg.mxu0
    %v230 = vtanh.pop %v227
    %v231 = vpack.c.bf16 %v230, %v230
    %s232 = scalar_lea.vmem [#allocation5], 128
    %v233 = vld [vmem:[%s232] sm:$0xf]
    %v234 = vld [vmem:[%s232 + $0x4] sm:$0xf]
    %v235 = vld [vmem:[%s232 + $0x8] sm:$0xf]
    %v236 = vld [vmem:[%s232 + $0xc] sm:$0xf]
    %v237 = vld [vmem:[%s232 + $0x10] sm:$0xf]
    %v238 = vld [vmem:[%s232 + $0x14] sm:$0xf]
    %v239 = vld [vmem:[%s232 + $0x18] sm:$0xf]
    %v240 = vld [vmem:[%s232 + $0x1c] sm:$0xf]
    %v241 = vld [vmem:[%s232 + $0x20] sm:$0xf]
    %v242 = vld [vmem:[%s232 + $0x24] sm:$0xf]
    %v243 = vld [vmem:[%s232 + $0x28] sm:$0xf]
    %v244 = vld [vmem:[%s232 + $0x2c] sm:$0xf]
    %v245 = vld [vmem:[%s232 + $0x30] sm:$0xf]
    %v246 = vld [vmem:[%s232 + $0x34] sm:$0xf]
    %v247 = vld [vmem:[%s232 + $0x38] sm:$0xf]
    %v248 = vld [vmem:[%s232 + $0x3c] sm:$0xf]
    %s249 = scalar_lea.vmem [#allocation7], 2
    %v250 = vld [vmem:[%s249] sm:$0x1]
    %v252 = vperm.slane %v250, 0
    %v270 = vunpack.c.l.b16 %v233
    %v271 = vunpack.c.l.b16 %v234
    %v272 = vunpack.c.l.b16 %v235
    %v273 = vunpack.c.l.b16 %v236
    %v274 = vunpack.c.l.b16 %v237
    %v275 = vunpack.c.l.b16 %v238
    %v276 = vunpack.c.l.b16 %v239
    %v277 = vunpack.c.l.b16 %v240
    %v278 = vunpack.c.l.b16 %v241
    %v279 = vunpack.c.l.b16 %v242
    %v280 = vunpack.c.l.b16 %v243
    %v281 = vunpack.c.l.b16 %v244
    %v282 = vunpack.c.l.b16 %v245
    %v283 = vunpack.c.l.b16 %v246
    %v284 = vunpack.c.l.b16 %v247
    %v285 = vunpack.c.l.b16 %v248
    %v286 = vpack.c.b16 %v271, %v270
    %v287 = vpack.c.b16 %v273, %v272
    %v288 = vpack.c.b16 %v275, %v274
    %v289 = vpack.c.b16 %v277, %v276
    %v290 = vpack.c.b16 %v279, %v278
    %v291 = vpack.c.b16 %v281, %v280
    %v292 = vpack.c.b16 %v283, %v282
    %v293 = vpack.c.b16 %v285, %v284
    %302 = vmatpush.bf16.msra.mxu0 %v293
    %303 = vmatpush.bf16.msra.mxu0 %v292
    %304 = vmatpush.bf16.msra.mxu0 %v291
    %305 = vmatpush.bf16.msra.mxu0 %v290
    %306 = vmatpush.bf16.msra.mxu0 %v289
    %307 = vmatpush.bf16.msra.mxu0 %v288
    %308 = vmatpush.bf16.msra.mxu0 %v287
    %309 = vmatpush.bf16.msra.mxu0 %v286
    %310 = vmatmul.bf16.gmra.mxu0 %v231
    %v311 = vpop.f32.mrf.mxu0
    %v312 = vadd.f32 %v252, %v311
    %v313 = vpop.f32.mrf.mxu0
    %314 = vdwg.mxu0
    %315 = vst [vmem:[#allocation9] sm:$0xff] %v312
    %v316 = vpack.c.bf16 %v312, %v312
    %s317 = scalar_lea.vmem [#allocation5], 192
    %v318 = vld [vmem:[%s317] sm:$0xf]
    %v319 = vld [vmem:[%s317 + $0x4] sm:$0xf]
    %v320 = vld [vmem:[%s317 + $0x8] sm:$0xf]
    %v321 = vld [vmem:[%s317 + $0xc] sm:$0xf]
    %v322 = vld [vmem:[%s317 + $0x10] sm:$0xf]
    %v323 = vld [vmem:[%s317 + $0x14] sm:$0xf]
    %v324 = vld [vmem:[%s317 + $0x18] sm:$0xf]
    %v325 = vld [vmem:[%s317 + $0x1c] sm:$0xf]
    %v326 = vld [vmem:[%s317 + $0x20] sm:$0xf]
    %v327 = vld [vmem:[%s317 + $0x24] sm:$0xf]
    %v328 = vld [vmem:[%s317 + $0x28] sm:$0xf]
    %v329 = vld [vmem:[%s317 + $0x2c] sm:$0xf]
    %v330 = vld [vmem:[%s317 + $0x30] sm:$0xf]
    %v331 = vld [vmem:[%s317 + $0x34] sm:$0xf]
    %v332 = vld [vmem:[%s317 + $0x38] sm:$0xf]
    %v333 = vld [vmem:[%s317 + $0x3c] sm:$0xf]
    %s334 = scalar_lea.vmem [#allocation7], 3
    %v335 = vld [vmem:[%s334] sm:$0x1]
    %v337 = vperm.slane %v335, 0
    %v355 = vunpack.c.l.b16 %v318
    %v356 = vunpack.c.l.b16 %v319
    %v357 = vunpack.c.l.b16 %v320
    %v358 = vunpack.c.l.b16 %v321
    %v359 = vunpack.c.l.b16 %v322
    %v360 = vunpack.c.l.b16 %v323
    %v361 = vunpack.c.l.b16 %v324
    %v362 = vunpack.c.l.b16 %v325
    %v363 = vunpack.c.l.b16 %v326
    %v364 = vunpack.c.l.b16 %v327
    %v365 = vunpack.c.l.b16 %v328
    %v366 = vunpack.c.l.b16 %v329
    %v367 = vunpack.c.l.b16 %v330
    %v368 = vunpack.c.l.b16 %v331
    %v369 = vunpack.c.l.b16 %v332
    %v370 = vunpack.c.l.b16 %v333
    %v371 = vpack.c.b16 %v356, %v355
    %v372 = vpack.c.b16 %v358, %v357
    %v373 = vpack.c.b16 %v360, %v359
    %v374 = vpack.c.b16 %v362, %v361
    %v375 = vpack.c.b16 %v364, %v363
    %v376 = vpack.c.b16 %v366, %v365
    %v377 = vpack.c.b16 %v368, %v367
    %v378 = vpack.c.b16 %v370, %v369
    %387 = vmatpush.bf16.msra.mxu0 %v378
    %388 = vmatpush.bf16.msra.mxu0 %v377
    %389 = vmatpush.bf16.msra.mxu0 %v376
    %390 = vmatpush.bf16.msra.mxu0 %v375
    %391 = vmatpush.bf16.msra.mxu0 %v374
    %392 = vmatpush.bf16.msra.mxu0 %v373
    %393 = vmatpush.bf16.msra.mxu0 %v372
    %394 = vmatpush.bf16.msra.mxu0 %v371
    %395 = vmatmul.bf16.gmra.mxu0 %v316
    %v396 = vpop.f32.mrf.mxu0
    %v397 = vadd.f32 %v337, %v396
    %v398 = vpop.f32.mrf.mxu0
    %399 = vdwg.mxu0
    %v400 = vtanh.pop %v397
    %v401 = vpack.c.bf16 %v400, %v400
    %s402 = scalar_lea.vmem [#allocation5], 256
    %v403 = vld [vmem:[%s402] sm:$0xf]
    %v404 = vld [vmem:[%s402 + $0x4] sm:$0xf]
    %v405 = vld [vmem:[%s402 + $0x8] sm:$0xf]
    %v406 = vld [vmem:[%s402 + $0xc] sm:$0xf]
    %v407 = vld [vmem:[%s402 + $0x10] sm:$0xf]
    %v408 = vld [vmem:[%s402 + $0x14] sm:$0xf]
    %v409 = vld [vmem:[%s402 + $0x18] sm:$0xf]
    %v410 = vld [vmem:[%s402 + $0x1c] sm:$0xf]
    %v411 = vld [vmem:[%s402 + $0x20] sm:$0xf]
    %v412 = vld [vmem:[%s402 + $0x24] sm:$0xf]
    %v413 = vld [vmem:[%s402 + $0x28] sm:$0xf]
    %v414 = vld [vmem:[%s402 + $0x2c] sm:$0xf]
    %v415 = vld [vmem:[%s402 + $0x30] sm:$0xf]
    %v416 = vld [vmem:[%s402 + $0x34] sm:$0xf]
    %v417 = vld [vmem:[%s402 + $0x38] sm:$0xf]
    %v418 = vld [vmem:[%s402 + $0x3c] sm:$0xf]
    %s419 = scalar_lea.vmem [#allocation7], 4
    %v420 = vld [vmem:[%s419] sm:$0x1]
    %v422 = vperm.slane %v420, 0
    %v440 = vunpack.c.l.b16 %v403
    %v441 = vunpack.c.l.b16 %v404
    %v442 = vunpack.c.l.b16 %v405
    %v443 = vunpack.c.l.b16 %v406
    %v444 = vunpack.c.l.b16 %v407
    %v445 = vunpack.c.l.b16 %v408
    %v446 = vunpack.c.l.b16 %v409
    %v447 = vunpack.c.l.b16 %v410
    %v448 = vunpack.c.l.b16 %v411
    %v449 = vunpack.c.l.b16 %v412
    %v450 = vunpack.c.l.b16 %v413
    %v451 = vunpack.c.l.b16 %v414
    %v452 = vunpack.c.l.b16 %v415
    %v453 = vunpack.c.l.b16 %v416
    %v454 = vunpack.c.l.b16 %v417
    %v455 = vunpack.c.l.b16 %v418
    %v456 = vpack.c.b16 %v441, %v440
    %v457 = vpack.c.b16 %v443, %v442
    %v458 = vpack.c.b16 %v445, %v444
    %v459 = vpack.c.b16 %v447, %v446
    %v460 = vpack.c.b16 %v449, %v448
    %v461 = vpack.c.b16 %v451, %v450
    %v462 = vpack.c.b16 %v453, %v452
    %v463 = vpack.c.b16 %v455, %v454
    %472 = vmatpush.bf16.msra.mxu0 %v463
    %473 = vmatpush.bf16.msra.mxu0 %v462
    %474 = vmatpush.bf16.msra.mxu0 %v461
    %475 = vmatpush.bf16.msra.mxu0 %v460
    %476 = vmatpush.bf16.msra.mxu0 %v459
    %477 = vmatpush.bf16.msra.mxu0 %v458
    %478 = vmatpush.bf16.msra.mxu0 %v457
    %479 = vmatpush.bf16.msra.mxu0 %v456
    %480 = vmatmul.bf16.gmra.mxu0 %v401
    %v481 = vpop.f32.mrf.mxu0
    %v482 = vadd.f32 %v422, %v481
    %v483 = vpop.f32.mrf.mxu0
    %484 = vdwg.mxu0
    %v485 = vtanh.pop %v482
    %v486 = vpack.c.bf16 %v485, %v485
    %s487 = scalar_lea.vmem [#allocation5], 320
    %v488 = vld [vmem:[%s487] sm:$0xf]
    %v489 = vld [vmem:[%s487 + $0x4] sm:$0xf]
    %v490 = vld [vmem:[%s487 + $0x8] sm:$0xf]
    %v491 = vld [vmem:[%s487 + $0xc] sm:$0xf]
    %v492 = vld [vmem:[%s487 + $0x10] sm:$0xf]
    %v493 = vld [vmem:[%s487 + $0x14] sm:$0xf]
    %v494 = vld [vmem:[%s487 + $0x18] sm:$0xf]
    %v495 = vld [vmem:[%s487 + $0x1c] sm:$0xf]
    %v496 = vld [vmem:[%s487 + $0x20] sm:$0xf]
    %v497 = vld [vmem:[%s487 + $0x24] sm:$0xf]
    %v498 = vld [vmem:[%s487 + $0x28] sm:$0xf]
    %v499 = vld [vmem:[%s487 + $0x2c] sm:$0xf]
    %v500 = vld [vmem:[%s487 + $0x30] sm:$0xf]
    %v501 = vld [vmem:[%s487 + $0x34] sm:$0xf]
    %v502 = vld [vmem:[%s487 + $0x38] sm:$0xf]
    %v503 = vld [vmem:[%s487 + $0x3c] sm:$0xf]
    %s504 = scalar_lea.vmem [#allocation7], 5
    %v505 = vld [vmem:[%s504] sm:$0x1]
    %v507 = vperm.slane %v505, 0
    %v525 = vunpack.c.l.b16 %v488
    %v526 = vunpack.c.l.b16 %v489
    %v527 = vunpack.c.l.b16 %v490
    %v528 = vunpack.c.l.b16 %v491
    %v529 = vunpack.c.l.b16 %v492
    %v530 = vunpack.c.l.b16 %v493
    %v531 = vunpack.c.l.b16 %v494
    %v532 = vunpack.c.l.b16 %v495
    %v533 = vunpack.c.l.b16 %v496
    %v534 = vunpack.c.l.b16 %v497
    %v535 = vunpack.c.l.b16 %v498
    %v536 = vunpack.c.l.b16 %v499
    %v537 = vunpack.c.l.b16 %v500
    %v538 = vunpack.c.l.b16 %v501
    %v539 = vunpack.c.l.b16 %v502
    %v540 = vunpack.c.l.b16 %v503
    %v541 = vpack.c.b16 %v526, %v525
    %v542 = vpack.c.b16 %v528, %v527
    %v543 = vpack.c.b16 %v530, %v529
    %v544 = vpack.c.b16 %v532, %v531
    %v545 = vpack.c.b16 %v534, %v533
    %v546 = vpack.c.b16 %v536, %v535
    %v547 = vpack.c.b16 %v538, %v537
    %v548 = vpack.c.b16 %v540, %v539
    %557 = vmatpush.bf16.msra.mxu0 %v548
    %558 = vmatpush.bf16.msra.mxu0 %v547
    %559 = vmatpush.bf16.msra.mxu0 %v546
    %560 = vmatpush.bf16.msra.mxu0 %v545
    %561 = vmatpush.bf16.msra.mxu0 %v544
    %562 = vmatpush.bf16.msra.mxu0 %v543
    %563 = vmatpush.bf16.msra.mxu0 %v542
    %564 = vmatpush.bf16.msra.mxu0 %v541
    %565 = vmatmul.bf16.gmra.mxu0 %v486
    %v566 = vpop.f32.mrf.mxu0
    %v567 = vadd.f32 %v507, %v566
    %v568 = vpop.f32.mrf.mxu0
    %569 = vdwg.mxu0
    %570 = vst [vmem:[#allocation8] sm:$0xff] %v567
    // Predicated region
    $region26: #{tpu_custom_call.1} parent=1 // pred_check
      _
    $region27: #{tpu_custom_call.1} parent=1 // pred_check_branch
      %572 = sbr.rel (0) target = $region29
    $region28: #{tpu_custom_call.1} parent=1 // pred_region
      %574 = vsyncadd [#allocation4], 0
      %s576 = sshll.u32 [#allocation8], 4
      %s577 = int_to_ptr.vmem [resolvable:$true] %s576
      %s578 = sshll.u32 %s3, 4
      %s579 = int_to_ptr.hbm [resolvable:$true] %s578
      %581 = dma.vmem_to_hbm [thread:$0]  %s577, 128, %s579, [#allocation4]
    $region29: #{tpu_custom_call.1} parent=1 // pred_fallthru
      _
    // Predicated region
    $region30: #{tpu_custom_call.1} parent=1 // pred_check
      _
    $region31: #{tpu_custom_call.1} parent=1 // pred_check_branch
      %583 = sbr.rel (0) target = $region33
    $region32: #{tpu_custom_call.1} parent=1 // pred_region
      %585 = vsyncadd [#allocation10], 0
      %s587 = sshll.u32 [#allocation9], 4
      %s588 = int_to_ptr.vmem [resolvable:$true] %s587
      %s589 = sshll.u32 %s4, 4
      %s590 = int_to_ptr.hbm [resolvable:$true] %s589
      %592 = dma.vmem_to_hbm [thread:$0]  %s588, 128, %s590, [#allocation10]
    $region33: #{tpu_custom_call.1} parent=1 // pred_fallthru
      _
    // Predicated region
    $region34: #{tpu_custom_call.1} parent=1 // pred_check
      _
    $region35: #{tpu_custom_call.1} parent=1 // pred_check_branch
      %594 = sbr.rel (0) target = $region37
    $region36: #{tpu_custom_call.1} parent=1 // pred_region
      %596 = dma.done [#allocation4], 128
    $region37: #{tpu_custom_call.1} parent=1 // pred_fallthru
      _
    // Predicated region
    $region38: #{tpu_custom_call.1} parent=1 // pred_check
      _
    $region39: #{tpu_custom_call.1} parent=1 // pred_check_branch
      %598 = sbr.rel (0) target = $region41
    $region40: #{tpu_custom_call.1} parent=1 // pred_region
      %600 = dma.done [#allocation10], 128
    $region41: #{tpu_custom_call.1} parent=1 // pred_fallthru
      _
    %601 = vsyncpa [#allocation3], 1
    %602 = vsyncpa [#allocation6], 1
    %603 = vsyncpa [#allocation4], 1
    %604 = vsyncpa [#allocation10], 1

</llo_original>
